<compile_context>
chip_gen: v7x
topology: tpu7x:2x2x1
jax: 0.10.0
libtpu: 0.0.40
codegen_flags: <defaults>
</compile_context>

<pallas_src>
import jax
import jax.numpy as jnp
from jax import lax
from jax.experimental import pallas as pl
from jax.experimental.pallas import tpu as pltpu


def _round_up(x, m):
    return (x + m - 1) // m * m


def dan_kernel(comb_ref, t_hi_ref, t_lo_ref, w1_ref, b1_ref, w2_ref, b2_ref,
               out_ref):
    TB, S = comb_ref.shape
    VP = t_hi_ref.shape[0]

    comb = comb_ref[...]                                   # (TB, S) int32
    iota = lax.broadcasted_iota(jnp.int32, (TB, VP), 1)    # lane-major iota

    # counts[b, k] = #{s : comb[b, s] == k}.  Values <= S, exact in bf16
    # (native single-pass MXU operand dtype on v6e/v7x).
    counts = (comb[:, 0:1] == iota).astype(jnp.bfloat16)
    for s in range(1, S):                                  # S is small & static
        counts = counts + (comb[:, s:s + 1] == iota).astype(jnp.bfloat16)

    # summed = counts @ T, with T pre-split (wrapper-side) into bf16 hi + lo.
    summed = jnp.dot(counts, t_hi_ref[...], preferred_element_type=jnp.float32)
    summed = summed + jnp.dot(counts, t_lo_ref[...],
                              preferred_element_type=jnp.float32)

    # fc1 + ReLU + fc2 (C padded to 128 lanes -> lane-dense store).
    h = jnp.dot(summed, w1_ref[...],
                preferred_element_type=jnp.float32) + b1_ref[...]
    h = jnp.maximum(h, 0.0)
    out = jnp.dot(h, w2_ref[...],
                  preferred_element_type=jnp.float32) + b2_ref[...]
    out_ref[...] = out.astype(out_ref.dtype)


def dan_forward(words, positions, params, *, block_b=512):
    """words, positions: int32 (B, S). Returns (B, num_classes) float32."""
    wt = params["word_embed"]        # (V, D)
    pt = params["position_embed"]    # (P=64, D)
    w1, b1 = params["w1"], params["b1"]      # (D, H), (1, H)
    w2, b2 = params["w2"], params["b2"]      # (H, C), (1, C)

    B, S = words.shape
    V, D = wt.shape
    P = pt.shape[0]
    H = w1.shape[1]
    C = w2.shape[1]

    # Combined (word, position) table T[v*P + p] = wt[v] * pt[p], padded to a
    # lane-dense multiple of 128 rows and split into bf16 hi + bf16 residual.
    t = (wt[:, None, :] * pt[None, :, :]).reshape(V * P, D)
    VP = V * P
    VP_pad = _round_up(VP, 128)
    if VP_pad != VP:
        t = jnp.pad(t, ((0, VP_pad - VP), (0, 0)))   # padded rows never hit
    t_hi = t.astype(jnp.bfloat16)
    t_lo = (t - t_hi.astype(jnp.float32)).astype(jnp.bfloat16)

    # Fused index tensor: one lane-dense compare per sequence slot in-kernel.
    comb = words.astype(jnp.int32) * P + positions.astype(jnp.int32)   # (B, S)

    # Lane-dense output: pad C up to a multiple of 128.
    C_pad = _round_up(C, 128)
    if C_pad != C:
        w2 = jnp.pad(w2, ((0, 0), (0, C_pad - C)))
        b2 = jnp.pad(b2, ((0, 0), (0, C_pad - C)))

    # Batch tile: multiple of 8, capped at block_b; keep >= 2 grid steps when
    # possible so "parallel" can shard across both TensorCores on v7x.
    TB = min(block_b, _round_up(B, 8))
    if _round_up(B, TB) // TB < 2 and TB >= 16:
        TB = _round_up(TB // 2, 8)
    B_pad = _round_up(B, TB)
    if B_pad != B:
        comb = jnp.pad(comb, ((0, B_pad - B), (0, 0)))   # pad index 0 is valid

    grid = (B_pad // TB,)

    out = pl.pallas_call(
        dan_kernel,
        out_shape=jax.ShapeDtypeStruct((B_pad, C_pad), jnp.float32),
        grid_spec=pltpu.PrefetchScalarGridSpec(
            num_scalar_prefetch=0,
            grid=grid,
            in_specs=[
                pl.BlockSpec((TB, S), lambda i: (i, 0)),        # fused indices
                pl.BlockSpec((VP_pad, D), lambda i: (0, 0)),    # T hi (bf16)
                pl.BlockSpec((VP_pad, D), lambda i: (0, 0)),    # T lo (bf16)
                pl.BlockSpec((D, H), lambda i: (0, 0)),         # w1
                pl.BlockSpec((1, H), lambda i: (0, 0)),         # b1
                pl.BlockSpec((H, C_pad), lambda i: (0, 0)),     # w2 (padded)
                pl.BlockSpec((1, C_pad), lambda i: (0, 0)),     # b2 (padded)
            ],
            out_specs=pl.BlockSpec((TB, C_pad), lambda i: (i, 0)),
        ),
        compiler_params=pltpu.CompilerParams(
            dimension_semantics=("parallel",),
            vmem_limit_bytes=32 * 1024 * 1024,
        ),
    )(comb, t_hi, t_lo, w1, b1, w2, b2)

    return out[:B, :C]


def init_params(key, embed_dim, intermediate_dim, num_classes):
    k0, k1, k2, k3, k4, k5 = jax.random.split(key, 6)
    return {
        "word_embed": jax.random.normal(k0, (num_classes, embed_dim), jnp.float32),
        "position_embed": jax.random.normal(k1, (64, embed_dim), jnp.float32),
        "w1": jax.random.normal(k2, (embed_dim, intermediate_dim), jnp.float32)
               * (1.0 / jnp.sqrt(embed_dim)),
        "b1": jax.random.normal(k3, (1, intermediate_dim), jnp.float32) * 0.01,
        "w2": jax.random.normal(k4, (intermediate_dim, num_classes), jnp.float32)
               * (1.0 / jnp.sqrt(intermediate_dim)),
        "b2": jax.random.normal(k5, (1, num_classes), jnp.float32) * 0.01,
    }


def dan_reference(words, positions, params):
    we = jnp.take(params["word_embed"], words, axis=0)
    pe = jnp.take(params["position_embed"], positions, axis=0)
    s = jnp.sum(we * pe, axis=1)
    h = jnp.maximum(s @ params["w1"] + params["b1"], 0.0)
    return h @ params["w2"] + params["b2"]


if __name__ == "__main__":
    # Small shapes consistent with the module's forward.
    B, S = 4, 8            # batch, sequence length (positions must be < 64)
    EMBED_DIM = 128        # embed_dimension
    INTER_DIM = 128        # intermediate_dimension
    NUM_CLASSES = 8        # num_classes (= word vocab size in the module)

    key = jax.random.PRNGKey(0)
    kp, kw, kpos = jax.random.split(key, 3)

    params = init_params(kp, EMBED_DIM, INTER_DIM, NUM_CLASSES)
    words = jax.random.randint(kw, (B, S), 0, NUM_CLASSES, dtype=jnp.int32)
    positions = jax.random.randint(kpos, (B, S), 0, 64, dtype=jnp.int32)

    out = dan_forward(words, positions, params)
    out = jax.block_until_ready(out)

    ref = dan_reference(words, positions, params)
    assert out.shape == (B, NUM_CLASSES)
    assert jnp.allclose(out, ref, atol=3e-3, rtol=3e-3), (
        float(jnp.max(jnp.abs(out - ref))))
    print("KERNEL_OK")
</pallas_src>

<mosaic_0001>
module attributes {stable_mosaic.version = 11 : i64} {
  func.func @dan_kernel(%arg0: i32, %arg1: memref<8x8xi32, #tpu.memory_space<vmem>>, %arg2: memref<512x128xbf16, #tpu.memory_space<vmem>>, %arg3: memref<512x128xbf16, #tpu.memory_space<vmem>>, %arg4: memref<128x128xf32, #tpu.memory_space<vmem>>, %arg5: memref<1x128xf32, #tpu.memory_space<vmem>>, %arg6: memref<128x128xf32, #tpu.memory_space<vmem>>, %arg7: memref<1x128xf32, #tpu.memory_space<vmem>>, %arg8: memref<8x128xf32, #tpu.memory_space<vmem>>) attributes {dimension_semantics = [#tpu.dimension_semantics<parallel>], iteration_bounds = array<i64: 1>, scalar_prefetch = 0 : i64, scratch_operands = 0 : i64, tpu.core_type = #tpu.core_type<tc>, window_params = [{transform_indices = @transform_0, window_bounds = array<i64: 8, 8>}, {pipeline_mode = #tpu.pipeline_mode<synchronous>, transform_indices = @transform_1, window_bounds = array<i64: 512, 128>}, {pipeline_mode = #tpu.pipeline_mode<synchronous>, transform_indices = @transform_2, window_bounds = array<i64: 512, 128>}, {pipeline_mode = #tpu.pipeline_mode<synchronous>, transform_indices = @transform_3, window_bounds = array<i64: 128, 128>}, {pipeline_mode = #tpu.pipeline_mode<synchronous>, transform_indices = @transform_4, window_bounds = array<i64: 1, 128>}, {pipeline_mode = #tpu.pipeline_mode<synchronous>, transform_indices = @transform_5, window_bounds = array<i64: 128, 128>}, {pipeline_mode = #tpu.pipeline_mode<synchronous>, transform_indices = @transform_6, window_bounds = array<i64: 1, 128>}, {transform_indices = @transform_7, window_bounds = array<i64: 8, 128>}]} {
    %c0 = arith.constant 0 : index
    %c0_0 = arith.constant 0 : index
    %0 = vector.load %arg1[%c0, %c0_0] : memref<8x8xi32, #tpu.memory_space<vmem>>, vector<8x8xi32>
    %1 = tpu.iota {dimensions = array<i32: 1>} : vector<8x512xi32>
    %2 = vector.extract_strided_slice %0 {offsets = [0, 0], sizes = [8, 1], strides = [1, 1]} : vector<8x8xi32> to vector<8x1xi32>
    %3 = vector.broadcast %2 : vector<8x1xi32> to vector<8x512xi32>
    %4 = arith.cmpi eq, %3, %1 : vector<8x512xi32>
    %5 = arith.extui %4 : vector<8x512xi1> to vector<8x512xi32>
    %6 = arith.sitofp %5 : vector<8x512xi32> to vector<8x512xf32>
    %7 = arith.truncf %6 : vector<8x512xf32> to vector<8x512xbf16>
    %8 = vector.extract_strided_slice %0 {offsets = [0, 1], sizes = [8, 1], strides = [1, 1]} : vector<8x8xi32> to vector<8x1xi32>
    %9 = vector.broadcast %8 : vector<8x1xi32> to vector<8x512xi32>
    %10 = arith.cmpi eq, %9, %1 : vector<8x512xi32>
    %11 = arith.extui %10 : vector<8x512xi1> to vector<8x512xi32>
    %12 = arith.sitofp %11 : vector<8x512xi32> to vector<8x512xf32>
    %13 = arith.truncf %12 : vector<8x512xf32> to vector<8x512xbf16>
    %14 = arith.addf %7, %13 : vector<8x512xbf16>
    %15 = vector.extract_strided_slice %0 {offsets = [0, 2], sizes = [8, 1], strides = [1, 1]} : vector<8x8xi32> to vector<8x1xi32>
    %16 = vector.broadcast %15 : vector<8x1xi32> to vector<8x512xi32>
    %17 = arith.cmpi eq, %16, %1 : vector<8x512xi32>
    %18 = arith.extui %17 : vector<8x512xi1> to vector<8x512xi32>
    %19 = arith.sitofp %18 : vector<8x512xi32> to vector<8x512xf32>
    %20 = arith.truncf %19 : vector<8x512xf32> to vector<8x512xbf16>
    %21 = arith.addf %14, %20 : vector<8x512xbf16>
    %22 = vector.extract_strided_slice %0 {offsets = [0, 3], sizes = [8, 1], strides = [1, 1]} : vector<8x8xi32> to vector<8x1xi32>
    %23 = vector.broadcast %22 : vector<8x1xi32> to vector<8x512xi32>
    %24 = arith.cmpi eq, %23, %1 : vector<8x512xi32>
    %25 = arith.extui %24 : vector<8x512xi1> to vector<8x512xi32>
    %26 = arith.sitofp %25 : vector<8x512xi32> to vector<8x512xf32>
    %27 = arith.truncf %26 : vector<8x512xf32> to vector<8x512xbf16>
    %28 = arith.addf %21, %27 : vector<8x512xbf16>
    %29 = vector.extract_strided_slice %0 {offsets = [0, 4], sizes = [8, 1], strides = [1, 1]} : vector<8x8xi32> to vector<8x1xi32>
    %30 = vector.broadcast %29 : vector<8x1xi32> to vector<8x512xi32>
    %31 = arith.cmpi eq, %30, %1 : vector<8x512xi32>
    %32 = arith.extui %31 : vector<8x512xi1> to vector<8x512xi32>
    %33 = arith.sitofp %32 : vector<8x512xi32> to vector<8x512xf32>
    %34 = arith.truncf %33 : vector<8x512xf32> to vector<8x512xbf16>
    %35 = arith.addf %28, %34 : vector<8x512xbf16>
    %36 = vector.extract_strided_slice %0 {offsets = [0, 5], sizes = [8, 1], strides = [1, 1]} : vector<8x8xi32> to vector<8x1xi32>
    %37 = vector.broadcast %36 : vector<8x1xi32> to vector<8x512xi32>
    %38 = arith.cmpi eq, %37, %1 : vector<8x512xi32>
    %39 = arith.extui %38 : vector<8x512xi1> to vector<8x512xi32>
    %40 = arith.sitofp %39 : vector<8x512xi32> to vector<8x512xf32>
    %41 = arith.truncf %40 : vector<8x512xf32> to vector<8x512xbf16>
    %42 = arith.addf %35, %41 : vector<8x512xbf16>
    %43 = vector.extract_strided_slice %0 {offsets = [0, 6], sizes = [8, 1], strides = [1, 1]} : vector<8x8xi32> to vector<8x1xi32>
    %44 = vector.broadcast %43 : vector<8x1xi32> to vector<8x512xi32>
    %45 = arith.cmpi eq, %44, %1 : vector<8x512xi32>
    %46 = arith.extui %45 : vector<8x512xi1> to vector<8x512xi32>
    %47 = arith.sitofp %46 : vector<8x512xi32> to vector<8x512xf32>
    %48 = arith.truncf %47 : vector<8x512xf32> to vector<8x512xbf16>
    %49 = arith.addf %42, %48 : vector<8x512xbf16>
    %50 = vector.extract_strided_slice %0 {offsets = [0, 7], sizes = [8, 1], strides = [1, 1]} : vector<8x8xi32> to vector<8x1xi32>
    %51 = vector.broadcast %50 : vector<8x1xi32> to vector<8x512xi32>
    %52 = arith.cmpi eq, %51, %1 : vector<8x512xi32>
    %53 = arith.extui %52 : vector<8x512xi1> to vector<8x512xi32>
    %54 = arith.sitofp %53 : vector<8x512xi32> to vector<8x512xf32>
    %55 = arith.truncf %54 : vector<8x512xf32> to vector<8x512xbf16>
    %56 = arith.addf %49, %55 : vector<8x512xbf16>
    %c0_1 = arith.constant 0 : index
    %c0_2 = arith.constant 0 : index
    %57 = vector.load %arg2[%c0_1, %c0_2] : memref<512x128xbf16, #tpu.memory_space<vmem>>, vector<512x128xbf16>
    %cst = arith.constant dense<0.000000e+00> : vector<8x128xf32>
    %58 = tpu.matmul %56, %57, %cst {dimension_numbers = #tpu.dot_dimension_numbers<[1], [0], [0], [1], [0, 0, 1, 1], [], []>} : vector<8x512xbf16>, vector<512x128xbf16>, vector<8x128xf32> -> vector<8x128xf32>
    %c0_3 = arith.constant 0 : index
    %c0_4 = arith.constant 0 : index
    %59 = vector.load %arg3[%c0_3, %c0_4] : memref<512x128xbf16, #tpu.memory_space<vmem>>, vector<512x128xbf16>
    %cst_5 = arith.constant dense<0.000000e+00> : vector<8x128xf32>
    %60 = tpu.matmul %56, %59, %cst_5 {dimension_numbers = #tpu.dot_dimension_numbers<[1], [0], [0], [1], [0, 0, 1, 1], [], []>} : vector<8x512xbf16>, vector<512x128xbf16>, vector<8x128xf32> -> vector<8x128xf32>
    %61 = arith.addf %58, %60 : vector<8x128xf32>
    %c0_6 = arith.constant 0 : index
    %c0_7 = arith.constant 0 : index
    %62 = vector.load %arg4[%c0_6, %c0_7] : memref<128x128xf32, #tpu.memory_space<vmem>>, vector<128x128xf32>
    %cst_8 = arith.constant dense<0.000000e+00> : vector<8x128xf32>
    %63 = tpu.matmul %61, %62, %cst_8 {dimension_numbers = #tpu.dot_dimension_numbers<[1], [0], [0], [1], [0, 0, 1, 1], [], []>} : vector<8x128xf32>, vector<128x128xf32>, vector<8x128xf32> -> vector<8x128xf32>
    %c0_9 = arith.constant 0 : index
    %c0_10 = arith.constant 0 : index
    %64 = vector.load %arg5[%c0_9, %c0_10] : memref<1x128xf32, #tpu.memory_space<vmem>>, vector<1x128xf32>
    %65 = vector.broadcast %64 : vector<1x128xf32> to vector<8x128xf32>
    %66 = arith.addf %63, %65 : vector<8x128xf32>
    %cst_11 = arith.constant 0.000000e+00 : f32
    %67 = vector.broadcast %cst_11 : f32 to vector<8x128xf32>
    %68 = arith.maximumf %66, %67 : vector<8x128xf32>
    %c0_12 = arith.constant 0 : index
    %c0_13 = arith.constant 0 : index
    %69 = vector.load %arg6[%c0_12, %c0_13] : memref<128x128xf32, #tpu.memory_space<vmem>>, vector<128x128xf32>
    %cst_14 = arith.constant dense<0.000000e+00> : vector<8x128xf32>
    %70 = tpu.matmul %68, %69, %cst_14 {dimension_numbers = #tpu.dot_dimension_numbers<[1], [0], [0], [1], [0, 0, 1, 1], [], []>} : vector<8x128xf32>, vector<128x128xf32>, vector<8x128xf32> -> vector<8x128xf32>
    %c0_15 = arith.constant 0 : index
    %c0_16 = arith.constant 0 : index
    %71 = vector.load %arg7[%c0_15, %c0_16] : memref<1x128xf32, #tpu.memory_space<vmem>>, vector<1x128xf32>
    %72 = vector.broadcast %71 : vector<1x128xf32> to vector<8x128xf32>
    %73 = arith.addf %70, %72 : vector<8x128xf32>
    %c0_17 = arith.constant 0 : index
    %c0_18 = arith.constant 0 : index
    %74 = vector.load %arg8[%c0_17, %c0_18] : memref<8x128xf32, #tpu.memory_space<vmem>>, vector<8x128xf32>
    tpu.vector_store %arg8[%c0_17, %c0_18], %73 {strides = array<i32>} : memref<8x128xf32, #tpu.memory_space<vmem>>, vector<8x128xf32>,
    return
  }
  func.func @transform_0(%arg0: i32) -> (i32, i32) {
    %c0_i32 = arith.constant 0 : i32
    %c0_i32_0 = arith.constant 0 : i32
    return %arg0, %c0_i32 : i32, i32
  }
  func.func @transform_1(%arg0: i32) -> (i32, i32) {
    %c0_i32 = arith.constant 0 : i32
    %c0_i32_0 = arith.constant 0 : i32
    %c0_i32_1 = arith.constant 0 : i32
    return %c0_i32, %c0_i32_0 : i32, i32
  }
  func.func @transform_2(%arg0: i32) -> (i32, i32) {
    %c0_i32 = arith.constant 0 : i32
    %c0_i32_0 = arith.constant 0 : i32
    %c0_i32_1 = arith.constant 0 : i32
    return %c0_i32, %c0_i32_0 : i32, i32
  }
  func.func @transform_3(%arg0: i32) -> (i32, i32) {
    %c0_i32 = arith.constant 0 : i32
    %c0_i32_0 = arith.constant 0 : i32
    %c0_i32_1 = arith.constant 0 : i32
    return %c0_i32, %c0_i32_0 : i32, i32
  }
  func.func @transform_4(%arg0: i32) -> (i32, i32) {
    %c0_i32 = arith.constant 0 : i32
    %c0_i32_0 = arith.constant 0 : i32
    %c0_i32_1 = arith.constant 0 : i32
    return %c0_i32, %c0_i32_0 : i32, i32
  }
  func.func @transform_5(%arg0: i32) -> (i32, i32) {
    %c0_i32 = arith.constant 0 : i32
    %c0_i32_0 = arith.constant 0 : i32
    %c0_i32_1 = arith.constant 0 : i32
    return %c0_i32, %c0_i32_0 : i32, i32
  }
  func.func @transform_6(%arg0: i32) -> (i32, i32) {
    %c0_i32 = arith.constant 0 : i32
    %c0_i32_0 = arith.constant 0 : i32
    %c0_i32_1 = arith.constant 0 : i32
    return %c0_i32, %c0_i32_0 : i32, i32
  }
  func.func @transform_7(%arg0: i32) -> (i32, i32) {
    %c0_i32 = arith.constant 0 : i32
    %c0_i32_0 = arith.constant 0 : i32
    return %arg0, %c0_i32 : i32, i32
  }
}

</mosaic_0001>

<llo_original>
// kernel: tpu_custom_call.1
$region0: #{tpu_custom_call.1}
  #allocation0 [shape = 'u32[]', space=smem, size = 0x4, offset = 0x4, fixed_abs, tag = 'smem constant byte address 0x4 - core index']
  #allocation1 [shape = 'u32[144,128]{1,0:T(1,128)}', space=vmem, size = 0x12000, scoped, tag = 'internal scratch']
  %s0 = inlined_call_operand.hbm [shape: s32[8,8], index: 0, kind: input, shape index: {}]
  %s1 = inlined_call_operand.hbm [shape: bf16[512,128], index: 1, kind: input, shape index: {}]
  %s2 = inlined_call_operand.hbm [shape: bf16[512,128], index: 2, kind: input, shape index: {}]
  %s3 = inlined_call_operand.hbm [shape: f32[128,128], index: 3, kind: input, shape index: {}]
  %s4 = inlined_call_operand.vmem [shape: f32[1,128], index: 4, kind: input, shape index: {}]
  %s5 = inlined_call_operand.hbm [shape: f32[128,128], index: 5, kind: input, shape index: {}]
  %s6 = inlined_call_operand.vmem [shape: f32[1,128], index: 6, kind: input, shape index: {}]
  %s7 = inlined_call_operand.hbm [shape: f32[8,128], index: 7, kind: output, shape index: {}]
  %s8 = sld [smem:[#allocation0]]
  $region58: #{tpu_custom_call.1} parent=0
    _
  %s10 = ssub.s32 1, %s8
  %s11 = scalar_select 0, %s10, %s8
  $region1: #{tpu_custom_call.1} parent=0
    #allocation2 [shape = 'u8[4096]{0}', space=vmem, size = 0x1000, scoped, tag = 'input window, operand 0, single buffered']
    #allocation3 [shape = 's32[1]{0}', space=sflag, size = 0x4, scoped, tag = 'scoped memory for tpu_custom_call.1']
    #allocation4 [shape = 's32[1]{0}', space=sflag, size = 0x4, scoped, tag = 'scoped memory for tpu_custom_call.1']
    #allocation5 [shape = 'u8[131072]{0}', space=vmem, size = 0x20000, scoped, tag = 'input window, operand 1, single buffered']
    #allocation6 [shape = 's32[1]{0}', space=sflag, size = 0x4, scoped, tag = 'scoped memory for tpu_custom_call.1']
    #allocation7 [shape = 'u8[131072]{0}', space=vmem, size = 0x20000, scoped, tag = 'input window, operand 2, single buffered']
    #allocation8 [shape = 'u8[65536]{0}', space=vmem, size = 0x10000, scoped, tag = 'input window, operand 3, single buffered']
    #allocation9 [shape = 's32[1]{0}', space=sflag, size = 0x4, scoped, tag = 'scoped memory for tpu_custom_call.1']
    #allocation10 [shape = 'u8[65536]{0}', space=vmem, size = 0x10000, scoped, tag = 'input window, operand 5, single buffered']
    #allocation11 [shape = 'u8[4096]{0}', space=vmem, size = 0x1000, scoped, tag = 'output window, operand 0, single buffered']
    %12 = vsyncpa [#allocation3], 0
    %13 = vsyncpa [#allocation6], 0
    %14 = vsyncpa [#allocation9], 0
    %15 = vsyncpa [#allocation4], 0
    // Predicated region
    $region2: #{tpu_custom_call.1} parent=1 // pred_check
      _
    $region3: #{tpu_custom_call.1} parent=1 // pred_check_branch
      %17 = sbr.rel (0) target = $region5
    $region4: #{tpu_custom_call.1} parent=1 // pred_region
      %s19 = ssub.s32 128, 128
      %20 = vsyncadd [#allocation3], %s19
      %s22 = sshll.u32 [#allocation2], 4
      %s23 = int_to_ptr.vmem [resolvable:$true] %s22
      %25 = dma.hbm_to_vmem [thread:$0]  %s0, 128, %s23, [#allocation3]
    $region5: #{tpu_custom_call.1} parent=1 // pred_fallthru
      _
    // Predicated region
    $region6: #{tpu_custom_call.1} parent=1 // pred_check
      _
    $region7: #{tpu_custom_call.1} parent=1 // pred_check_branch
      %27 = sbr.rel (0) target = $region9
    $region8: #{tpu_custom_call.1} parent=1 // pred_region
      %s29 = ssub.s32 4096, 4096
      %30 = vsyncadd [#allocation6], %s29
      %s31 = sshll.u32 [#allocation5], 4
      %s32 = int_to_ptr.vmem [resolvable:$true] %s31
      %37 = dma.hbm_to_vmem [thread:$0]  %s1, 4096, %s32, [#allocation6], 64, 64, 4
    $region9: #{tpu_custom_call.1} parent=1 // pred_fallthru
      _
    // Predicated region
    $region10: #{tpu_custom_call.1} parent=1 // pred_check
      _
    $region11: #{tpu_custom_call.1} parent=1 // pred_check_branch
      %39 = sbr.rel (0) target = $region13
    $region12: #{tpu_custom_call.1} parent=1 // pred_region
      %s41 = ssub.s32 4096, 4096
      %42 = vsyncadd [#allocation6], %s41
      %s43 = sshll.u32 [#allocation7], 4
      %s44 = int_to_ptr.vmem [resolvable:$true] %s43
      %49 = dma.hbm_to_vmem [thread:$0]  %s2, 4096, %s44, [#allocation6], 64, 64, 4
    $region13: #{tpu_custom_call.1} parent=1 // pred_fallthru
      _
    // Predicated region
    $region14: #{tpu_custom_call.1} parent=1 // pred_check
      _
    $region15: #{tpu_custom_call.1} parent=1 // pred_check_branch
      %51 = sbr.rel (0) target = $region17
    $region16: #{tpu_custom_call.1} parent=1 // pred_region
      %s53 = ssub.s32 2048, 2048
      %54 = vsyncadd [#allocation9], %s53
      %s55 = sshll.u32 [#allocation8], 4
      %s56 = int_to_ptr.vmem [resolvable:$true] %s55
      %61 = dma.hbm_to_vmem [thread:$0]  %s3, 2048, %s56, [#allocation9], 128, 128, 8
    $region17: #{tpu_custom_call.1} parent=1 // pred_fallthru
      _
    // Predicated region
    $region18: #{tpu_custom_call.1} parent=1 // pred_check
      _
    $region19: #{tpu_custom_call.1} parent=1 // pred_check_branch
      %63 = sbr.rel (0) target = $region21
    $region20: #{tpu_custom_call.1} parent=1 // pred_region
      _
    $region21: #{tpu_custom_call.1} parent=1 // pred_fallthru
      _
    // Predicated region
    $region22: #{tpu_custom_call.1} parent=1 // pred_check
      _
    $region23: #{tpu_custom_call.1} parent=1 // pred_check_branch
      %65 = sbr.rel (0) target = $region25
    $region24: #{tpu_custom_call.1} parent=1 // pred_region
      %s67 = ssub.s32 2048, 2048
      %68 = vsyncadd [#allocation9], %s67
      %s69 = sshll.u32 [#allocation10], 4
      %s70 = int_to_ptr.vmem [resolvable:$true] %s69
      %75 = dma.hbm_to_vmem [thread:$0]  %s5, 2048, %s70, [#allocation9], 128, 128, 8
    $region25: #{tpu_custom_call.1} parent=1 // pred_fallthru
      _
    // Predicated region
    $region26: #{tpu_custom_call.1} parent=1 // pred_check
      _
    $region27: #{tpu_custom_call.1} parent=1 // pred_check_branch
      %77 = sbr.rel (0) target = $region29
    $region28: #{tpu_custom_call.1} parent=1 // pred_region
      _
    $region29: #{tpu_custom_call.1} parent=1 // pred_fallthru
      _
    // Predicated region
    $region30: #{tpu_custom_call.1} parent=1 // pred_check
      _
    $region31: #{tpu_custom_call.1} parent=1 // pred_check_branch
      %79 = sbr.rel (0) target = $region33
    $region32: #{tpu_custom_call.1} parent=1 // pred_region
      %80 = dma.done [#allocation3], 128
    $region33: #{tpu_custom_call.1} parent=1 // pred_fallthru
      _
    // Predicated region
    $region34: #{tpu_custom_call.1} parent=1 // pred_check
      _
    $region35: #{tpu_custom_call.1} parent=1 // pred_check_branch
      %82 = sbr.rel (0) target = $region37
    $region36: #{tpu_custom_call.1} parent=1 // pred_region
      %83 = dma.done [#allocation6], 4096
    $region37: #{tpu_custom_call.1} parent=1 // pred_fallthru
      _
    // Predicated region
    $region38: #{tpu_custom_call.1} parent=1 // pred_check
      _
    $region39: #{tpu_custom_call.1} parent=1 // pred_check_branch
      %85 = sbr.rel (0) target = $region41
    $region40: #{tpu_custom_call.1} parent=1 // pred_region
      %86 = dma.done [#allocation6], 4096
    $region41: #{tpu_custom_call.1} parent=1 // pred_fallthru
      _
    // Predicated region
    $region42: #{tpu_custom_call.1} parent=1 // pred_check
      _
    $region43: #{tpu_custom_call.1} parent=1 // pred_check_branch
      %88 = sbr.rel (0) target = $region45
    $region44: #{tpu_custom_call.1} parent=1 // pred_region
      %89 = dma.done [#allocation9], 2048
    $region45: #{tpu_custom_call.1} parent=1 // pred_fallthru
      _
    // Predicated region
    $region46: #{tpu_custom_call.1} parent=1 // pred_check
      _
    $region47: #{tpu_custom_call.1} parent=1 // pred_check_branch
      %91 = sbr.rel (0) target = $region49
    $region48: #{tpu_custom_call.1} parent=1 // pred_region
      %92 = dma.done [#allocation9], 2048
    $region49: #{tpu_custom_call.1} parent=1 // pred_fallthru
      _
    %v94 = vld [vmem:[#allocation2] sm:$0xff]
    %v95 = vlaneseq
    %v96 = vand.u32 %v95, 127
    %v97 = vadd.s32 %v96, 128
    %v98 = vadd.s32 %v96, 256
    %v99 = vadd.s32 %v96, 384
    %100 = vset.pattern.permute.xlu0 0
    %101 = vperm.xlu0 %100, %v94
    %v102 = vpop.permute.xlu0 %101
    %vm103 = vcmp.eq.s32.totalorder %v102, %v96
    %vm104 = vcmp.eq.s32.totalorder %v102, %v97
    %vm105 = vcmp.eq.s32.totalorder %v102, %v98
    %vm106 = vcmp.eq.s32.totalorder %v102, %v99
    %v107 = vsel %vm103, 1, 0
    %v108 = vsel %vm104, 1, 0
    %v109 = vsel %vm105, 1, 0
    %v110 = vsel %vm106, 1, 0
    %v111 = vcvt.s32.f32 %v107
    %v112 = vcvt.s32.f32 %v108
    %v113 = vcvt.s32.f32 %v109
    %v114 = vcvt.s32.f32 %v110
    %v115 = vpack.c.bf16 %v111, %v111
    %v116 = vpack.c.bf16 %v112, %v112
    %v117 = vpack.c.bf16 %v113, %v113
    %v118 = vpack.c.bf16 %v114, %v114
    %119 = vset.pattern.permute.xlu0 1
    %120 = vperm.xlu0 %119, %v94
    %v121 = vpop.permute.xlu0 %120
    %vm122 = vcmp.eq.s32.totalorder %v121, %v96
    %vm123 = vcmp.eq.s32.totalorder %v121, %v97
    %vm124 = vcmp.eq.s32.totalorder %v121, %v98
    %vm125 = vcmp.eq.s32.totalorder %v121, %v99
    %v126 = vsel %vm122, 1, 0
    %v127 = vsel %vm123, 1, 0
    %v128 = vsel %vm124, 1, 0
    %v129 = vsel %vm125, 1, 0
    %v130 = vcvt.s32.f32 %v126
    %v131 = vcvt.s32.f32 %v127
    %v132 = vcvt.s32.f32 %v128
    %v133 = vcvt.s32.f32 %v129
    %v134 = vpack.c.bf16 %v130, %v130
    %v135 = vpack.c.bf16 %v131, %v131
    %v136 = vpack.c.bf16 %v132, %v132
    %v137 = vpack.c.bf16 %v133, %v133
    %v138 = vadd.bf16 %v115, %v134
    %v139 = vadd.bf16 %v116, %v135
    %v140 = vadd.bf16 %v117, %v136
    %v141 = vadd.bf16 %v118, %v137
    %142 = vset.pattern.permute.xlu0 2
    %143 = vperm.xlu0 %142, %v94
    %v144 = vpop.permute.xlu0 %143
    %vm145 = vcmp.eq.s32.totalorder %v144, %v96
    %vm146 = vcmp.eq.s32.totalorder %v144, %v97
    %vm147 = vcmp.eq.s32.totalorder %v144, %v98
    %vm148 = vcmp.eq.s32.totalorder %v144, %v99
    %v149 = vsel %vm145, 1, 0
    %v150 = vsel %vm146, 1, 0
    %v151 = vsel %vm147, 1, 0
    %v152 = vsel %vm148, 1, 0
    %v153 = vcvt.s32.f32 %v149
    %v154 = vcvt.s32.f32 %v150
    %v155 = vcvt.s32.f32 %v151
    %v156 = vcvt.s32.f32 %v152
    %v157 = vpack.c.bf16 %v153, %v153
    %v158 = vpack.c.bf16 %v154, %v154
    %v159 = vpack.c.bf16 %v155, %v155
    %v160 = vpack.c.bf16 %v156, %v156
    %v161 = vadd.bf16 %v138, %v157
    %v162 = vadd.bf16 %v139, %v158
    %v163 = vadd.bf16 %v140, %v159
    %v164 = vadd.bf16 %v141, %v160
    %165 = vset.pattern.permute.xlu0 3
    %166 = vperm.xlu0 %165, %v94
    %v167 = vpop.permute.xlu0 %166
    %vm168 = vcmp.eq.s32.totalorder %v167, %v96
    %vm169 = vcmp.eq.s32.totalorder %v167, %v97
    %vm170 = vcmp.eq.s32.totalorder %v167, %v98
    %vm171 = vcmp.eq.s32.totalorder %v167, %v99
    %v172 = vsel %vm168, 1, 0
    %v173 = vsel %vm169, 1, 0
    %v174 = vsel %vm170, 1, 0
    %v175 = vsel %vm171, 1, 0
    %v176 = vcvt.s32.f32 %v172
    %v177 = vcvt.s32.f32 %v173
    %v178 = vcvt.s32.f32 %v174
    %v179 = vcvt.s32.f32 %v175
    %v180 = vpack.c.bf16 %v176, %v176
    %v181 = vpack.c.bf16 %v177, %v177
    %v182 = vpack.c.bf16 %v178, %v178
    %v183 = vpack.c.bf16 %v179, %v179
    %v184 = vadd.bf16 %v161, %v180
    %v185 = vadd.bf16 %v162, %v181
    %v186 = vadd.bf16 %v163, %v182
    %v187 = vadd.bf16 %v164, %v183
    %188 = vset.pattern.permute.xlu0 4
    %189 = vperm.xlu0 %188, %v94
    %v190 = vpop.permute.xlu0 %189
    %vm191 = vcmp.eq.s32.totalorder %v190, %v96
    %vm192 = vcmp.eq.s32.totalorder %v190, %v97
    %vm193 = vcmp.eq.s32.totalorder %v190, %v98
    %vm194 = vcmp.eq.s32.totalorder %v190, %v99
    %v195 = vsel %vm191, 1, 0
    %v196 = vsel %vm192, 1, 0
    %v197 = vsel %vm193, 1, 0
    %v198 = vsel %vm194, 1, 0
    %v199 = vcvt.s32.f32 %v195
    %v200 = vcvt.s32.f32 %v196
    %v201 = vcvt.s32.f32 %v197
    %v202 = vcvt.s32.f32 %v198
    %v203 = vpack.c.bf16 %v199, %v199
    %v204 = vpack.c.bf16 %v200, %v200
    %v205 = vpack.c.bf16 %v201, %v201
    %v206 = vpack.c.bf16 %v202, %v202
    %v207 = vadd.bf16 %v184, %v203
    %v208 = vadd.bf16 %v185, %v204
    %v209 = vadd.bf16 %v186, %v205
    %v210 = vadd.bf16 %v187, %v206
    %211 = vset.pattern.permute.xlu0 5
    %212 = vperm.xlu0 %211, %v94
    %v213 = vpop.permute.xlu0 %212
    %vm214 = vcmp.eq.s32.totalorder %v213, %v96
    %vm215 = vcmp.eq.s32.totalorder %v213, %v97
    %vm216 = vcmp.eq.s32.totalorder %v213, %v98
    %vm217 = vcmp.eq.s32.totalorder %v213, %v99
    %v218 = vsel %vm214, 1, 0
    %v219 = vsel %vm215, 1, 0
    %v220 = vsel %vm216, 1, 0
    %v221 = vsel %vm217, 1, 0
    %v222 = vcvt.s32.f32 %v218
    %v223 = vcvt.s32.f32 %v219
    %v224 = vcvt.s32.f32 %v220
    %v225 = vcvt.s32.f32 %v221
    %v226 = vpack.c.bf16 %v222, %v222
    %v227 = vpack.c.bf16 %v223, %v223
    %v228 = vpack.c.bf16 %v224, %v224
    %v229 = vpack.c.bf16 %v225, %v225
    %v230 = vadd.bf16 %v207, %v226
    %v231 = vadd.bf16 %v208, %v227
    %v232 = vadd.bf16 %v209, %v228
    %v233 = vadd.bf16 %v210, %v229
    %234 = vset.pattern.permute.xlu0 6
    %235 = vperm.xlu0 %234, %v94
    %v236 = vpop.permute.xlu0 %235
    %vm237 = vcmp.eq.s32.totalorder %v236, %v96
    %vm238 = vcmp.eq.s32.totalorder %v236, %v97
    %vm239 = vcmp.eq.s32.totalorder %v236, %v98
    %vm240 = vcmp.eq.s32.totalorder %v236, %v99
    %v241 = vsel %vm237, 1, 0
    %v242 = vsel %vm238, 1, 0
    %v243 = vsel %vm239, 1, 0
    %v244 = vsel %vm240, 1, 0
    %v245 = vcvt.s32.f32 %v241
    %v246 = vcvt.s32.f32 %v242
    %v247 = vcvt.s32.f32 %v243
    %v248 = vcvt.s32.f32 %v244
    %v249 = vpack.c.bf16 %v245, %v245
    %v250 = vpack.c.bf16 %v246, %v246
    %v251 = vpack.c.bf16 %v247, %v247
    %v252 = vpack.c.bf16 %v248, %v248
    %v253 = vadd.bf16 %v230, %v249
    %v254 = vadd.bf16 %v231, %v250
    %v255 = vadd.bf16 %v232, %v251
    %v256 = vadd.bf16 %v233, %v252
    %257 = vset.pattern.permute.xlu0 7
    %258 = vperm.xlu0 %257, %v94
    %v259 = vpop.permute.xlu0 %258
    %vm260 = vcmp.eq.s32.totalorder %v259, %v96
    %vm261 = vcmp.eq.s32.totalorder %v259, %v97
    %vm262 = vcmp.eq.s32.totalorder %v259, %v98
    %vm263 = vcmp.eq.s32.totalorder %v259, %v99
    %v264 = vsel %vm260, 1, 0
    %v265 = vsel %vm261, 1, 0
    %v266 = vsel %vm262, 1, 0
    %v267 = vsel %vm263, 1, 0
    %v268 = vcvt.s32.f32 %v264
    %v269 = vcvt.s32.f32 %v265
    %v270 = vcvt.s32.f32 %v266
    %v271 = vcvt.s32.f32 %v267
    %v272 = vpack.c.bf16 %v268, %v268
    %v273 = vpack.c.bf16 %v269, %v269
    %v274 = vpack.c.bf16 %v270, %v270
    %v275 = vpack.c.bf16 %v271, %v271
    %v276 = vadd.bf16 %v253, %v272
    %v277 = vadd.bf16 %v254, %v273
    %v278 = vadd.bf16 %v255, %v274
    %v279 = vadd.bf16 %v256, %v275
    %v280 = vld [vmem:[#allocation5] sm:$0xf]
    %v281 = vld [vmem:[#allocation5 + $0x4] sm:$0xf]
    %v282 = vld [vmem:[#allocation5 + $0x8] sm:$0xf]
    %v283 = vld [vmem:[#allocation5 + $0xc] sm:$0xf]
    %v284 = vld [vmem:[#allocation5 + $0x10] sm:$0xf]
    %v285 = vld [vmem:[#allocation5 + $0x14] sm:$0xf]
    %v286 = vld [vmem:[#allocation5 + $0x18] sm:$0xf]
    %v287 = vld [vmem:[#allocation5 + $0x1c] sm:$0xf]
    %v288 = vld [vmem:[#allocation5 + $0x20] sm:$0xf]
    %v289 = vld [vmem:[#allocation5 + $0x24] sm:$0xf]
    %v290 = vld [vmem:[#allocation5 + $0x28] sm:$0xf]
    %v291 = vld [vmem:[#allocation5 + $0x2c] sm:$0xf]
    %v292 = vld [vmem:[#allocation5 + $0x30] sm:$0xf]
    %v293 = vld [vmem:[#allocation5 + $0x34] sm:$0xf]
    %v294 = vld [vmem:[#allocation5 + $0x38] sm:$0xf]
    %v295 = vld [vmem:[#allocation5 + $0x3c] sm:$0xf]
    %v296 = vld [vmem:[#allocation5 + $0x40] sm:$0xf]
    %v297 = vld [vmem:[#allocation5 + $0x44] sm:$0xf]
    %v298 = vld [vmem:[#allocation5 + $0x48] sm:$0xf]
    %v299 = vld [vmem:[#allocation5 + $0x4c] sm:$0xf]
    %v300 = vld [vmem:[#allocation5 + $0x50] sm:$0xf]
    %v301 = vld [vmem:[#allocation5 + $0x54] sm:$0xf]
    %v302 = vld [vmem:[#allocation5 + $0x58] sm:$0xf]
    %v303 = vld [vmem:[#allocation5 + $0x5c] sm:$0xf]
    %v304 = vld [vmem:[#allocation5 + $0x60] sm:$0xf]
    %v305 = vld [vmem:[#allocation5 + $0x64] sm:$0xf]
    %v306 = vld [vmem:[#allocation5 + $0x68] sm:$0xf]
    %v307 = vld [vmem:[#allocation5 + $0x6c] sm:$0xf]
    %v308 = vld [vmem:[#allocation5 + $0x70] sm:$0xf]
    %v309 = vld [vmem:[#allocation5 + $0x74] sm:$0xf]
    %v310 = vld [vmem:[#allocation5 + $0x78] sm:$0xf]
    %v311 = vld [vmem:[#allocation5 + $0x7c] sm:$0xf]
    %v312 = vld [vmem:[#allocation5 + $0x80] sm:$0xf]
    %v313 = vld [vmem:[#allocation5 + $0x84] sm:$0xf]
    %v314 = vld [vmem:[#allocation5 + $0x88] sm:$0xf]
    %v315 = vld [vmem:[#allocation5 + $0x8c] sm:$0xf]
    %v316 = vld [vmem:[#allocation5 + $0x90] sm:$0xf]
    %v317 = vld [vmem:[#allocation5 + $0x94] sm:$0xf]
    %v318 = vld [vmem:[#allocation5 + $0x98] sm:$0xf]
    %v319 = vld [vmem:[#allocation5 + $0x9c] sm:$0xf]
    %v320 = vld [vmem:[#allocation5 + $0xa0] sm:$0xf]
    %v321 = vld [vmem:[#allocation5 + $0xa4] sm:$0xf]
    %v322 = vld [vmem:[#allocation5 + $0xa8] sm:$0xf]
    %v323 = vld [vmem:[#allocation5 + $0xac] sm:$0xf]
    %v324 = vld [vmem:[#allocation5 + $0xb0] sm:$0xf]
    %v325 = vld [vmem:[#allocation5 + $0xb4] sm:$0xf]
    %v326 = vld [vmem:[#allocation5 + $0xb8] sm:$0xf]
    %v327 = vld [vmem:[#allocation5 + $0xbc] sm:$0xf]
    %v328 = vld [vmem:[#allocation5 + $0xc0] sm:$0xf]
    %v329 = vld [vmem:[#allocation5 + $0xc4] sm:$0xf]
    %v330 = vld [vmem:[#allocation5 + $0xc8] sm:$0xf]
    %v331 = vld [vmem:[#allocation5 + $0xcc] sm:$0xf]
    %v332 = vld [vmem:[#allocation5 + $0xd0] sm:$0xf]
    %v333 = vld [vmem:[#allocation5 + $0xd4] sm:$0xf]
    %v334 = vld [vmem:[#allocation5 + $0xd8] sm:$0xf]
    %v335 = vld [vmem:[#allocation5 + $0xdc] sm:$0xf]
    %v336 = vld [vmem:[#allocation5 + $0xe0] sm:$0xf]
    %v337 = vld [vmem:[#allocation5 + $0xe4] sm:$0xf]
    %v338 = vld [vmem:[#allocation5 + $0xe8] sm:$0xf]
    %v339 = vld [vmem:[#allocation5 + $0xec] sm:$0xf]
    %v340 = vld [vmem:[#allocation5 + $0xf0] sm:$0xf]
    %v341 = vld [vmem:[#allocation5 + $0xf4] sm:$0xf]
    %v342 = vld [vmem:[#allocation5 + $0xf8] sm:$0xf]
    %v343 = vld [vmem:[#allocation5 + $0xfc] sm:$0xf]
    %v344 = vld [vmem:[#allocation7] sm:$0xf]
    %v345 = vld [vmem:[#allocation7 + $0x4] sm:$0xf]
    %v346 = vld [vmem:[#allocation7 + $0x8] sm:$0xf]
    %v347 = vld [vmem:[#allocation7 + $0xc] sm:$0xf]
    %v348 = vld [vmem:[#allocation7 + $0x10] sm:$0xf]
    %v349 = vld [vmem:[#allocation7 + $0x14] sm:$0xf]
    %v350 = vld [vmem:[#allocation7 + $0x18] sm:$0xf]
    %v351 = vld [vmem:[#allocation7 + $0x1c] sm:$0xf]
    %v352 = vld [vmem:[#allocation7 + $0x20] sm:$0xf]
    %v353 = vld [vmem:[#allocation7 + $0x24] sm:$0xf]
    %v354 = vld [vmem:[#allocation7 + $0x28] sm:$0xf]
    %v355 = vld [vmem:[#allocation7 + $0x2c] sm:$0xf]
    %v356 = vld [vmem:[#allocation7 + $0x30] sm:$0xf]
    %v357 = vld [vmem:[#allocation7 + $0x34] sm:$0xf]
    %v358 = vld [vmem:[#allocation7 + $0x38] sm:$0xf]
    %v359 = vld [vmem:[#allocation7 + $0x3c] sm:$0xf]
    %v360 = vld [vmem:[#allocation7 + $0x40] sm:$0xf]
    %v361 = vld [vmem:[#allocation7 + $0x44] sm:$0xf]
    %v362 = vld [vmem:[#allocation7 + $0x48] sm:$0xf]
    %v363 = vld [vmem:[#allocation7 + $0x4c] sm:$0xf]
    %v364 = vld [vmem:[#allocation7 + $0x50] sm:$0xf]
    %v365 = vld [vmem:[#allocation7 + $0x54] sm:$0xf]
    %v366 = vld [vmem:[#allocation7 + $0x58] sm:$0xf]
    %v367 = vld [vmem:[#allocation7 + $0x5c] sm:$0xf]
    %v368 = vld [vmem:[#allocation7 + $0x60] sm:$0xf]
    %v369 = vld [vmem:[#allocation7 + $0x64] sm:$0xf]
    %v370 = vld [vmem:[#allocation7 + $0x68] sm:$0xf]
    %v371 = vld [vmem:[#allocation7 + $0x6c] sm:$0xf]
    %v372 = vld [vmem:[#allocation7 + $0x70] sm:$0xf]
    %v373 = vld [vmem:[#allocation7 + $0x74] sm:$0xf]
    %v374 = vld [vmem:[#allocation7 + $0x78] sm:$0xf]
    %v375 = vld [vmem:[#allocation7 + $0x7c] sm:$0xf]
    %v376 = vld [vmem:[#allocation7 + $0x80] sm:$0xf]
    %v377 = vld [vmem:[#allocation7 + $0x84] sm:$0xf]
    %v378 = vld [vmem:[#allocation7 + $0x88] sm:$0xf]
    %v379 = vld [vmem:[#allocation7 + $0x8c] sm:$0xf]
    %v380 = vld [vmem:[#allocation7 + $0x90] sm:$0xf]
    %v381 = vld [vmem:[#allocation7 + $0x94] sm:$0xf]
    %v382 = vld [vmem:[#allocation7 + $0x98] sm:$0xf]
    %v383 = vld [vmem:[#allocation7 + $0x9c] sm:$0xf]
    %v384 = vld [vmem:[#allocation7 + $0xa0] sm:$0xf]
    %v385 = vld [vmem:[#allocation7 + $0xa4] sm:$0xf]
    %v386 = vld [vmem:[#allocation7 + $0xa8] sm:$0xf]
    %v387 = vld [vmem:[#allocation7 + $0xac] sm:$0xf]
    %v388 = vld [vmem:[#allocation7 + $0xb0] sm:$0xf]
    %v389 = vld [vmem:[#allocation7 + $0xb4] sm:$0xf]
    %v390 = vld [vmem:[#allocation7 + $0xb8] sm:$0xf]
    %v391 = vld [vmem:[#allocation7 + $0xbc] sm:$0xf]
    %v392 = vld [vmem:[#allocation7 + $0xc0] sm:$0xf]
    %v393 = vld [vmem:[#allocation7 + $0xc4] sm:$0xf]
    %v394 = vld [vmem:[#allocation7 + $0xc8] sm:$0xf]
    %v395 = vld [vmem:[#allocation7 + $0xcc] sm:$0xf]
    %v396 = vld [vmem:[#allocation7 + $0xd0] sm:$0xf]
    %v397 = vld [vmem:[#allocation7 + $0xd4] sm:$0xf]
    %v398 = vld [vmem:[#allocation7 + $0xd8] sm:$0xf]
    %v399 = vld [vmem:[#allocation7 + $0xdc] sm:$0xf]
    %v400 = vld [vmem:[#allocation7 + $0xe0] sm:$0xf]
    %v401 = vld [vmem:[#allocation7 + $0xe4] sm:$0xf]
    %v402 = vld [vmem:[#allocation7 + $0xe8] sm:$0xf]
    %v403 = vld [vmem:[#allocation7 + $0xec] sm:$0xf]
    %v404 = vld [vmem:[#allocation7 + $0xf0] sm:$0xf]
    %v405 = vld [vmem:[#allocation7 + $0xf4] sm:$0xf]
    %v406 = vld [vmem:[#allocation7 + $0xf8] sm:$0xf]
    %v407 = vld [vmem:[#allocation7 + $0xfc] sm:$0xf]
    %v472 = vunpack.c.l.b16 %v344
    %v473 = vunpack.c.l.b16 %v345
    %v474 = vunpack.c.l.b16 %v346
    %v475 = vunpack.c.l.b16 %v347
    %v476 = vunpack.c.l.b16 %v348
    %v477 = vunpack.c.l.b16 %v349
    %v478 = vunpack.c.l.b16 %v350
    %v479 = vunpack.c.l.b16 %v351
    %v480 = vunpack.c.l.b16 %v352
    %v481 = vunpack.c.l.b16 %v353
    %v482 = vunpack.c.l.b16 %v354
    %v483 = vunpack.c.l.b16 %v355
    %v484 = vunpack.c.l.b16 %v356
    %v485 = vunpack.c.l.b16 %v357
    %v486 = vunpack.c.l.b16 %v358
    %v487 = vunpack.c.l.b16 %v359
    %v488 = vunpack.c.l.b16 %v360
    %v489 = vunpack.c.l.b16 %v361
    %v490 = vunpack.c.l.b16 %v362
    %v491 = vunpack.c.l.b16 %v363
    %v492 = vunpack.c.l.b16 %v364
    %v493 = vunpack.c.l.b16 %v365
    %v494 = vunpack.c.l.b16 %v366
    %v495 = vunpack.c.l.b16 %v367
    %v496 = vunpack.c.l.b16 %v368
    %v497 = vunpack.c.l.b16 %v369
    %v498 = vunpack.c.l.b16 %v370
    %v499 = vunpack.c.l.b16 %v371
    %v500 = vunpack.c.l.b16 %v372
    %v501 = vunpack.c.l.b16 %v373
    %v502 = vunpack.c.l.b16 %v374
    %v503 = vunpack.c.l.b16 %v375
    %v504 = vunpack.c.l.b16 %v376
    %v505 = vunpack.c.l.b16 %v377
    %v506 = vunpack.c.l.b16 %v378
    %v507 = vunpack.c.l.b16 %v379
    %v508 = vunpack.c.l.b16 %v380
    %v509 = vunpack.c.l.b16 %v381
    %v510 = vunpack.c.l.b16 %v382
    %v511 = vunpack.c.l.b16 %v383
    %v512 = vunpack.c.l.b16 %v384
    %v513 = vunpack.c.l.b16 %v385
    %v514 = vunpack.c.l.b16 %v386
    %v515 = vunpack.c.l.b16 %v387
    %v516 = vunpack.c.l.b16 %v388
    %v517 = vunpack.c.l.b16 %v389
    %v518 = vunpack.c.l.b16 %v390
    %v519 = vunpack.c.l.b16 %v391
    %v520 = vunpack.c.l.b16 %v392
    %v521 = vunpack.c.l.b16 %v393
    %v522 = vunpack.c.l.b16 %v394
    %v523 = vunpack.c.l.b16 %v395
    %v524 = vunpack.c.l.b16 %v396
    %v525 = vunpack.c.l.b16 %v397
    %v526 = vunpack.c.l.b16 %v398
    %v527 = vunpack.c.l.b16 %v399
    %v528 = vunpack.c.l.b16 %v400
    %v529 = vunpack.c.l.b16 %v401
    %v530 = vunpack.c.l.b16 %v402
    %v531 = vunpack.c.l.b16 %v403
    %v532 = vunpack.c.l.b16 %v404
    %v533 = vunpack.c.l.b16 %v405
    %v534 = vunpack.c.l.b16 %v406
    %v535 = vunpack.c.l.b16 %v407
    %v536 = vpack.c.b16 %v473, %v472
    %v537 = vpack.c.b16 %v475, %v474
    %v538 = vpack.c.b16 %v477, %v476
    %v539 = vpack.c.b16 %v479, %v478
    %v540 = vpack.c.b16 %v481, %v480
    %v541 = vpack.c.b16 %v483, %v482
    %v542 = vpack.c.b16 %v485, %v484
    %v543 = vpack.c.b16 %v487, %v486
    %v544 = vpack.c.b16 %v489, %v488
    %v545 = vpack.c.b16 %v491, %v490
    %v546 = vpack.c.b16 %v493, %v492
    %v547 = vpack.c.b16 %v495, %v494
    %v548 = vpack.c.b16 %v497, %v496
    %v549 = vpack.c.b16 %v499, %v498
    %v550 = vpack.c.b16 %v501, %v500
    %v551 = vpack.c.b16 %v503, %v502
    %v552 = vpack.c.b16 %v505, %v504
    %v553 = vpack.c.b16 %v507, %v506
    %v554 = vpack.c.b16 %v509, %v508
    %v555 = vpack.c.b16 %v511, %v510
    %v556 = vpack.c.b16 %v513, %v512
    %v557 = vpack.c.b16 %v515, %v514
    %v558 = vpack.c.b16 %v517, %v516
    %v559 = vpack.c.b16 %v519, %v518
    %v560 = vpack.c.b16 %v521, %v520
    %v561 = vpack.c.b16 %v523, %v522
    %v562 = vpack.c.b16 %v525, %v524
    %v563 = vpack.c.b16 %v527, %v526
    %v564 = vpack.c.b16 %v529, %v528
    %v565 = vpack.c.b16 %v531, %v530
    %v566 = vpack.c.b16 %v533, %v532
    %v567 = vpack.c.b16 %v535, %v534
    %600 = vmatprep.subr.bf16.mxu0 0
    %601 = vmatpush1.bf16.msra.mxu0 %v536
    %602 = vmatprep.subr.bf16.mxu0 0
    %603 = vmatpush1.bf16.msra.mxu0 %v537
    %604 = vmatprep.subr.bf16.mxu0 0
    %605 = vmatpush1.bf16.msra.mxu0 %v538
    %606 = vmatprep.subr.bf16.mxu0 0
    %607 = vmatpush1.bf16.msra.mxu0 %v539
    %608 = vmatprep.subr.bf16.mxu0 0
    %609 = vmatpush1.bf16.msra.mxu0 %v540
    %610 = vmatprep.subr.bf16.mxu0 0
    %611 = vmatpush1.bf16.msra.mxu0 %v541
    %612 = vmatprep.subr.bf16.mxu0 0
    %613 = vmatpush1.bf16.msra.mxu0 %v542
    %614 = vmatprep.subr.bf16.mxu0 0
    %615 = vmatpush1.bf16.msra.mxu0 %v543
    %616 = vmatprep.subr.bf16.mxu0 0
    %617 = vmatpush1.bf16.msra.mxu0 %v544
    %618 = vmatprep.subr.bf16.mxu0 0
    %619 = vmatpush1.bf16.msra.mxu0 %v545
    %620 = vmatprep.subr.bf16.mxu0 0
    %621 = vmatpush1.bf16.msra.mxu0 %v546
    %622 = vmatprep.subr.bf16.mxu0 0
    %623 = vmatpush1.bf16.msra.mxu0 %v547
    %624 = vmatprep.subr.bf16.mxu0 0
    %625 = vmatpush1.bf16.msra.mxu0 %v548
    %626 = vmatprep.subr.bf16.mxu0 0
    %627 = vmatpush1.bf16.msra.mxu0 %v549
    %628 = vmatprep.subr.bf16.mxu0 0
    %629 = vmatpush1.bf16.msra.mxu0 %v550
    %630 = vmatprep.subr.bf16.mxu0 0
    %631 = vmatpush1.bf16.msra.mxu0 %v551
    %632 = vmatprep.mubr.bf16.mxu0 %v277
    %633 = vmatmul.mubr.bf16.gmra.mrb[0].mxu0 %v276
    %v634 = vpop.f32.mrb[0].mxu0
    %v635 = vadd.f32 0.0, %v634
    %v636 = vpop.f32.mrb[0].mxu0
    %v637 = vpop.f32.mrb[0].mxu0
    %v638 = vpop.f32.mrb[0].mxu0
    %639 = vdwg.mxu0
    %640 = vmatprep.subr.bf16.mxu0 0
    %641 = vmatpush1.bf16.msra.mxu0 %v552
    %642 = vmatprep.subr.bf16.mxu0 0
    %643 = vmatpush1.bf16.msra.mxu0 %v553
    %644 = vmatprep.subr.bf16.mxu0 0
    %645 = vmatpush1.bf16.msra.mxu0 %v554
    %646 = vmatprep.subr.bf16.mxu0 0
    %647 = vmatpush1.bf16.msra.mxu0 %v555
    %648 = vmatprep.subr.bf16.mxu0 0
    %649 = vmatpush1.bf16.msra.mxu0 %v556
    %650 = vmatprep.subr.bf16.mxu0 0
    %651 = vmatpush1.bf16.msra.mxu0 %v557
    %652 = vmatprep.subr.bf16.mxu0 0
    %653 = vmatpush1.bf16.msra.mxu0 %v558
    %654 = vmatprep.subr.bf16.mxu0 0
    %655 = vmatpush1.bf16.msra.mxu0 %v559
    %656 = vmatprep.subr.bf16.mxu0 0
    %657 = vmatpush1.bf16.msra.mxu0 %v560
    %658 = vmatprep.subr.bf16.mxu0 0
    %659 = vmatpush1.bf16.msra.mxu0 %v561
    %660 = vmatprep.subr.bf16.mxu0 0
    %661 = vmatpush1.bf16.msra.mxu0 %v562
    %662 = vmatprep.subr.bf16.mxu0 0
    %663 = vmatpush1.bf16.msra.mxu0 %v563
    %664 = vmatprep.subr.bf16.mxu0 0
    %665 = vmatpush1.bf16.msra.mxu0 %v564
    %666 = vmatprep.subr.bf16.mxu0 0
    %667 = vmatpush1.bf16.msra.mxu0 %v565
    %668 = vmatprep.subr.bf16.mxu0 0
    %669 = vmatpush1.bf16.msra.mxu0 %v566
    %670 = vmatprep.subr.bf16.mxu0 0
    %671 = vmatpush1.bf16.msra.mxu0 %v567
    %672 = vmatprep.mubr.bf16.mxu0 %v279
    %673 = vmatmul.mubr.bf16.gmra.mrb[0].mxu0 %v278
    %v674 = vpop.f32.mrb[0].mxu0
    %v675 = vadd.f32 %v635, %v674
    %v676 = vpop.f32.mrb[0].mxu0
    %v677 = vpop.f32.mrb[0].mxu0
    %v678 = vpop.f32.mrb[0].mxu0
    %679 = vdwg.mxu0
    %v744 = vunpack.c.l.b16 %v280
    %v745 = vunpack.c.l.b16 %v281
    %v746 = vunpack.c.l.b16 %v282
    %v747 = vunpack.c.l.b16 %v283
    %v748 = vunpack.c.l.b16 %v284
    %v749 = vunpack.c.l.b16 %v285
    %v750 = vunpack.c.l.b16 %v286
    %v751 = vunpack.c.l.b16 %v287
    %v752 = vunpack.c.l.b16 %v288
    %v753 = vunpack.c.l.b16 %v289
    %v754 = vunpack.c.l.b16 %v290
    %v755 = vunpack.c.l.b16 %v291
    %v756 = vunpack.c.l.b16 %v292
    %v757 = vunpack.c.l.b16 %v293
    %v758 = vunpack.c.l.b16 %v294
    %v759 = vunpack.c.l.b16 %v295
    %v760 = vunpack.c.l.b16 %v296
    %v761 = vunpack.c.l.b16 %v297
    %v762 = vunpack.c.l.b16 %v298
    %v763 = vunpack.c.l.b16 %v299
    %v764 = vunpack.c.l.b16 %v300
    %v765 = vunpack.c.l.b16 %v301
    %v766 = vunpack.c.l.b16 %v302
    %v767 = vunpack.c.l.b16 %v303
    %v768 = vunpack.c.l.b16 %v304
    %v769 = vunpack.c.l.b16 %v305
    %v770 = vunpack.c.l.b16 %v306
    %v771 = vunpack.c.l.b16 %v307
    %v772 = vunpack.c.l.b16 %v308
    %v773 = vunpack.c.l.b16 %v309
    %v774 = vunpack.c.l.b16 %v310
    %v775 = vunpack.c.l.b16 %v311
    %v776 = vunpack.c.l.b16 %v312
    %v777 = vunpack.c.l.b16 %v313
    %v778 = vunpack.c.l.b16 %v314
    %v779 = vunpack.c.l.b16 %v315
    %v780 = vunpack.c.l.b16 %v316
    %v781 = vunpack.c.l.b16 %v317
    %v782 = vunpack.c.l.b16 %v318
    %v783 = vunpack.c.l.b16 %v319
    %v784 = vunpack.c.l.b16 %v320
    %v785 = vunpack.c.l.b16 %v321
    %v786 = vunpack.c.l.b16 %v322
    %v787 = vunpack.c.l.b16 %v323
    %v788 = vunpack.c.l.b16 %v324
    %v789 = vunpack.c.l.b16 %v325
    %v790 = vunpack.c.l.b16 %v326
    %v791 = vunpack.c.l.b16 %v327
    %v792 = vunpack.c.l.b16 %v328
    %v793 = vunpack.c.l.b16 %v329
    %v794 = vunpack.c.l.b16 %v330
    %v795 = vunpack.c.l.b16 %v331
    %v796 = vunpack.c.l.b16 %v332
    %v797 = vunpack.c.l.b16 %v333
    %v798 = vunpack.c.l.b16 %v334
    %v799 = vunpack.c.l.b16 %v335
    %v800 = vunpack.c.l.b16 %v336
    %v801 = vunpack.c.l.b16 %v337
    %v802 = vunpack.c.l.b16 %v338
    %v803 = vunpack.c.l.b16 %v339
    %v804 = vunpack.c.l.b16 %v340
    %v805 = vunpack.c.l.b16 %v341
    %v806 = vunpack.c.l.b16 %v342
    %v807 = vunpack.c.l.b16 %v343
    %v808 = vpack.c.b16 %v745, %v744
    %v809 = vpack.c.b16 %v747, %v746
    %v810 = vpack.c.b16 %v749, %v748
    %v811 = vpack.c.b16 %v751, %v750
    %v812 = vpack.c.b16 %v753, %v752
    %v813 = vpack.c.b16 %v755, %v754
    %v814 = vpack.c.b16 %v757, %v756
    %v815 = vpack.c.b16 %v759, %v758
    %v816 = vpack.c.b16 %v761, %v760
    %v817 = vpack.c.b16 %v763, %v762
    %v818 = vpack.c.b16 %v765, %v764
    %v819 = vpack.c.b16 %v767, %v766
    %v820 = vpack.c.b16 %v769, %v768
    %v821 = vpack.c.b16 %v771, %v770
    %v822 = vpack.c.b16 %v773, %v772
    %v823 = vpack.c.b16 %v775, %v774
    %v824 = vpack.c.b16 %v777, %v776
    %v825 = vpack.c.b16 %v779, %v778
    %v826 = vpack.c.b16 %v781, %v780
    %v827 = vpack.c.b16 %v783, %v782
    %v828 = vpack.c.b16 %v785, %v784
    %v829 = vpack.c.b16 %v787, %v786
    %v830 = vpack.c.b16 %v789, %v788
    %v831 = vpack.c.b16 %v791, %v790
    %v832 = vpack.c.b16 %v793, %v792
    %v833 = vpack.c.b16 %v795, %v794
    %v834 = vpack.c.b16 %v797, %v796
    %v835 = vpack.c.b16 %v799, %v798
    %v836 = vpack.c.b16 %v801, %v800
    %v837 = vpack.c.b16 %v803, %v802
    %v838 = vpack.c.b16 %v805, %v804
    %v839 = vpack.c.b16 %v807, %v806
    %872 = vmatprep.subr.bf16.mxu0 0
    %873 = vmatpush1.bf16.msra.mxu0 %v808
    %874 = vmatprep.subr.bf16.mxu0 0
    %875 = vmatpush1.bf16.msra.mxu0 %v809
    %876 = vmatprep.subr.bf16.mxu0 0
    %877 = vmatpush1.bf16.msra.mxu0 %v810
    %878 = vmatprep.subr.bf16.mxu0 0
    %879 = vmatpush1.bf16.msra.mxu0 %v811
    %880 = vmatprep.subr.bf16.mxu0 0
    %881 = vmatpush1.bf16.msra.mxu0 %v812
    %882 = vmatprep.subr.bf16.mxu0 0
    %883 = vmatpush1.bf16.msra.mxu0 %v813
    %884 = vmatprep.subr.bf16.mxu0 0
    %885 = vmatpush1.bf16.msra.mxu0 %v814
    %886 = vmatprep.subr.bf16.mxu0 0
    %887 = vmatpush1.bf16.msra.mxu0 %v815
    %888 = vmatprep.subr.bf16.mxu0 0
    %889 = vmatpush1.bf16.msra.mxu0 %v816
    %890 = vmatprep.subr.bf16.mxu0 0
    %891 = vmatpush1.bf16.msra.mxu0 %v817
    %892 = vmatprep.subr.bf16.mxu0 0
    %893 = vmatpush1.bf16.msra.mxu0 %v818
    %894 = vmatprep.subr.bf16.mxu0 0
    %895 = vmatpush1.bf16.msra.mxu0 %v819
    %896 = vmatprep.subr.bf16.mxu0 0
    %897 = vmatpush1.bf16.msra.mxu0 %v820
    %898 = vmatprep.subr.bf16.mxu0 0
    %899 = vmatpush1.bf16.msra.mxu0 %v821
    %900 = vmatprep.subr.bf16.mxu0 0
    %901 = vmatpush1.bf16.msra.mxu0 %v822
    %902 = vmatprep.subr.bf16.mxu0 0
    %903 = vmatpush1.bf16.msra.mxu0 %v823
    %904 = vmatprep.mubr.bf16.mxu0 %v277
    %905 = vmatmul.mubr.bf16.gmra.mrb[0].mxu0 %v276
    %v906 = vpop.f32.mrb[0].mxu0
    %v907 = vadd.f32 %v675, %v906
    %v908 = vpop.f32.mrb[0].mxu0
    %v909 = vpop.f32.mrb[0].mxu0
    %v910 = vpop.f32.mrb[0].mxu0
    %911 = vdwg.mxu0
    %912 = vmatprep.subr.bf16.mxu0 0
    %913 = vmatpush1.bf16.msra.mxu0 %v824
    %914 = vmatprep.subr.bf16.mxu0 0
    %915 = vmatpush1.bf16.msra.mxu0 %v825
    %916 = vmatprep.subr.bf16.mxu0 0
    %917 = vmatpush1.bf16.msra.mxu0 %v826
    %918 = vmatprep.subr.bf16.mxu0 0
    %919 = vmatpush1.bf16.msra.mxu0 %v827
    %920 = vmatprep.subr.bf16.mxu0 0
    %921 = vmatpush1.bf16.msra.mxu0 %v828
    %922 = vmatprep.subr.bf16.mxu0 0
    %923 = vmatpush1.bf16.msra.mxu0 %v829
    %924 = vmatprep.subr.bf16.mxu0 0
    %925 = vmatpush1.bf16.msra.mxu0 %v830
    %926 = vmatprep.subr.bf16.mxu0 0
    %927 = vmatpush1.bf16.msra.mxu0 %v831
    %928 = vmatprep.subr.bf16.mxu0 0
    %929 = vmatpush1.bf16.msra.mxu0 %v832
    %930 = vmatprep.subr.bf16.mxu0 0
    %931 = vmatpush1.bf16.msra.mxu0 %v833
    %932 = vmatprep.subr.bf16.mxu0 0
    %933 = vmatpush1.bf16.msra.mxu0 %v834
    %934 = vmatprep.subr.bf16.mxu0 0
    %935 = vmatpush1.bf16.msra.mxu0 %v835
    %936 = vmatprep.subr.bf16.mxu0 0
    %937 = vmatpush1.bf16.msra.mxu0 %v836
    %938 = vmatprep.subr.bf16.mxu0 0
    %939 = vmatpush1.bf16.msra.mxu0 %v837
    %940 = vmatprep.subr.bf16.mxu0 0
    %941 = vmatpush1.bf16.msra.mxu0 %v838
    %942 = vmatprep.subr.bf16.mxu0 0
    %943 = vmatpush1.bf16.msra.mxu0 %v839
    %944 = vmatprep.mubr.bf16.mxu0 %v279
    %945 = vmatmul.mubr.bf16.gmra.mrb[0].mxu0 %v278
    %v946 = vpop.f32.mrb[0].mxu0
    %v947 = vadd.f32 %v907, %v946
    %v948 = vpop.f32.mrb[0].mxu0
    %v949 = vpop.f32.mrb[0].mxu0
    %v950 = vpop.f32.mrb[0].mxu0
    %951 = vdwg.mxu0
    %v952 = vld [vmem:[#allocation8] sm:$0xff]
    %v953 = vld [vmem:[#allocation8 + $0x8] sm:$0xff]
    %v954 = vld [vmem:[#allocation8 + $0x10] sm:$0xff]
    %v955 = vld [vmem:[#allocation8 + $0x18] sm:$0xff]
    %v956 = vld [vmem:[#allocation8 + $0x20] sm:$0xff]
    %v957 = vld [vmem:[#allocation8 + $0x28] sm:$0xff]
    %v958 = vld [vmem:[#allocation8 + $0x30] sm:$0xff]
    %v959 = vld [vmem:[#allocation8 + $0x38] sm:$0xff]
    %v960 = vld [vmem:[#allocation8 + $0x40] sm:$0xff]
    %v961 = vld [vmem:[#allocation8 + $0x48] sm:$0xff]
    %v962 = vld [vmem:[#allocation8 + $0x50] sm:$0xff]
    %v963 = vld [vmem:[#allocation8 + $0x58] sm:$0xff]
    %v964 = vld [vmem:[#allocation8 + $0x60] sm:$0xff]
    %v965 = vld [vmem:[#allocation8 + $0x68] sm:$0xff]
    %v966 = vld [vmem:[#allocation8 + $0x70] sm:$0xff]
    %v967 = vld [vmem:[#allocation8 + $0x78] sm:$0xff]
    %v968 = vld [vmem:[%s4] sm:$0x1]
    %v970 = vlaneseq
    %v971 = vshrl.u32 %v970, 7
    %v972 = vsub.s32 0, %v971
    %v973 = vrot.slane %v968, %v972
    %975 = vmatprep.subr.mxu0 0.0
    %976 = vmatpush1.msra.mxu0 %v952
    %977 = vmatprep.subr.mxu0 0.0
    %978 = vmatpush1.msra.mxu0 %v953
    %979 = vmatprep.subr.mxu0 0.0
    %980 = vmatpush1.msra.mxu0 %v954
    %981 = vmatprep.subr.mxu0 0.0
    %982 = vmatpush1.msra.mxu0 %v955
    %983 = vmatprep.subr.mxu0 0.0
    %984 = vmatpush1.msra.mxu0 %v956
    %985 = vmatprep.subr.mxu0 0.0
    %986 = vmatpush1.msra.mxu0 %v957
    %987 = vmatprep.subr.mxu0 0.0
    %988 = vmatpush1.msra.mxu0 %v958
    %989 = vmatprep.subr.mxu0 0.0
    %990 = vmatpush1.msra.mxu0 %v959
    %991 = vmatprep.subr.mxu0 0.0
    %992 = vmatpush1.msra.mxu0 %v960
    %993 = vmatprep.subr.mxu0 0.0
    %994 = vmatpush1.msra.mxu0 %v961
    %995 = vmatprep.subr.mxu0 0.0
    %996 = vmatpush1.msra.mxu0 %v962
    %997 = vmatprep.subr.mxu0 0.0
    %998 = vmatpush1.msra.mxu0 %v963
    %999 = vmatprep.subr.mxu0 0.0
    %1000 = vmatpush1.msra.mxu0 %v964
    %1001 = vmatprep.subr.mxu0 0.0
    %1002 = vmatpush1.msra.mxu0 %v965
    %1003 = vmatprep.subr.mxu0 0.0
    %1004 = vmatpush1.msra.mxu0 %v966
    %1005 = vmatprep.subr.mxu0 0.0
    %1006 = vmatpush1.msra.mxu0 %v967
    %1007 = vmatprep.subr.mxu0 0.0
    %1008 = vmatpush1.msra.mxu0 0.0
    %1009 = vmatprep.subr.mxu0 0.0
    %1010 = vmatpush1.msra.mxu0 0.0
    %1011 = vmatprep.subr.mxu0 0.0
    %1012 = vmatpush1.msra.mxu0 0.0
    %1013 = vmatprep.subr.mxu0 0.0
    %1014 = vmatpush1.msra.mxu0 0.0
    %1015 = vmatprep.subr.mxu0 0.0
    %1016 = vmatpush1.msra.mxu0 0.0
    %1017 = vmatprep.subr.mxu0 0.0
    %1018 = vmatpush1.msra.mxu0 0.0
    %1019 = vmatprep.subr.mxu0 0.0
    %1020 = vmatpush1.msra.mxu0 0.0
    %1021 = vmatprep.subr.mxu0 0.0
    %1022 = vmatpush1.msra.mxu0 0.0
    %1023 = vmatprep.subr.mxu0 0.0
    %1024 = vmatpush1.msra.mxu0 0.0
    %1025 = vmatprep.subr.mxu0 0.0
    %1026 = vmatpush1.msra.mxu0 0.0
    %1027 = vmatprep.subr.mxu0 0.0
    %1028 = vmatpush1.msra.mxu0 0.0
    %1029 = vmatprep.subr.mxu0 0.0
    %1030 = vmatpush1.msra.mxu0 0.0
    %1031 = vmatprep.subr.mxu0 0.0
    %1032 = vmatpush1.msra.mxu0 0.0
    %1033 = vmatprep.subr.mxu0 0.0
    %1034 = vmatpush1.msra.mxu0 0.0
    %1035 = vmatprep.subr.mxu0 0.0
    %1036 = vmatpush1.msra.mxu0 0.0
    %1037 = vmatprep.subr.mxu0 0.0
    %1038 = vmatpush1.msra.mxu0 0.0
    %1039 = vmatprep.mubr.f32.mxu0 0.0
    %1040 = vmatmul.mubr.f32.gmra.mrb[0].mxu0 %v947
    %v1041 = vpop.f32.mrb[0].mxu0
    %v1042 = vadd.f32 %v973, %v1041
    %v1043 = vpop.f32.mrb[0].mxu0
    %1044 = vdwg.mxu0
    %v1045 = vmax.f32 %v1042, 0.0
    %v1046 = vld [vmem:[#allocation10] sm:$0xff]
    %v1047 = vld [vmem:[#allocation10 + $0x8] sm:$0xff]
    %v1048 = vld [vmem:[#allocation10 + $0x10] sm:$0xff]
    %v1049 = vld [vmem:[#allocation10 + $0x18] sm:$0xff]
    %v1050 = vld [vmem:[#allocation10 + $0x20] sm:$0xff]
    %v1051 = vld [vmem:[#allocation10 + $0x28] sm:$0xff]
    %v1052 = vld [vmem:[#allocation10 + $0x30] sm:$0xff]
    %v1053 = vld [vmem:[#allocation10 + $0x38] sm:$0xff]
    %v1054 = vld [vmem:[#allocation10 + $0x40] sm:$0xff]
    %v1055 = vld [vmem:[#allocation10 + $0x48] sm:$0xff]
    %v1056 = vld [vmem:[#allocation10 + $0x50] sm:$0xff]
    %v1057 = vld [vmem:[#allocation10 + $0x58] sm:$0xff]
    %v1058 = vld [vmem:[#allocation10 + $0x60] sm:$0xff]
    %v1059 = vld [vmem:[#allocation10 + $0x68] sm:$0xff]
    %v1060 = vld [vmem:[#allocation10 + $0x70] sm:$0xff]
    %v1061 = vld [vmem:[#allocation10 + $0x78] sm:$0xff]
    %v1062 = vld [vmem:[%s6] sm:$0x1]
    %v1064 = vlaneseq
    %v1065 = vshrl.u32 %v1064, 7
    %v1066 = vsub.s32 0, %v1065
    %v1067 = vrot.slane %v1062, %v1066
    %1069 = vmatprep.subr.mxu0 0.0
    %1070 = vmatpush1.msra.mxu0 %v1046
    %1071 = vmatprep.subr.mxu0 0.0
    %1072 = vmatpush1.msra.mxu0 %v1047
    %1073 = vmatprep.subr.mxu0 0.0
    %1074 = vmatpush1.msra.mxu0 %v1048
    %1075 = vmatprep.subr.mxu0 0.0
    %1076 = vmatpush1.msra.mxu0 %v1049
    %1077 = vmatprep.subr.mxu0 0.0
    %1078 = vmatpush1.msra.mxu0 %v1050
    %1079 = vmatprep.subr.mxu0 0.0
    %1080 = vmatpush1.msra.mxu0 %v1051
    %1081 = vmatprep.subr.mxu0 0.0
    %1082 = vmatpush1.msra.mxu0 %v1052
    %1083 = vmatprep.subr.mxu0 0.0
    %1084 = vmatpush1.msra.mxu0 %v1053
    %1085 = vmatprep.subr.mxu0 0.0
    %1086 = vmatpush1.msra.mxu0 %v1054
    %1087 = vmatprep.subr.mxu0 0.0
    %1088 = vmatpush1.msra.mxu0 %v1055
    %1089 = vmatprep.subr.mxu0 0.0
    %1090 = vmatpush1.msra.mxu0 %v1056
    %1091 = vmatprep.subr.mxu0 0.0
    %1092 = vmatpush1.msra.mxu0 %v1057
    %1093 = vmatprep.subr.mxu0 0.0
    %1094 = vmatpush1.msra.mxu0 %v1058
    %1095 = vmatprep.subr.mxu0 0.0
    %1096 = vmatpush1.msra.mxu0 %v1059
    %1097 = vmatprep.subr.mxu0 0.0
    %1098 = vmatpush1.msra.mxu0 %v1060
    %1099 = vmatprep.subr.mxu0 0.0
    %1100 = vmatpush1.msra.mxu0 %v1061
    %1101 = vmatprep.subr.mxu0 0.0
    %1102 = vmatpush1.msra.mxu0 0.0
    %1103 = vmatprep.subr.mxu0 0.0
    %1104 = vmatpush1.msra.mxu0 0.0
    %1105 = vmatprep.subr.mxu0 0.0
    %1106 = vmatpush1.msra.mxu0 0.0
    %1107 = vmatprep.subr.mxu0 0.0
    %1108 = vmatpush1.msra.mxu0 0.0
    %1109 = vmatprep.subr.mxu0 0.0
    %1110 = vmatpush1.msra.mxu0 0.0
    %1111 = vmatprep.subr.mxu0 0.0
    %1112 = vmatpush1.msra.mxu0 0.0
    %1113 = vmatprep.subr.mxu0 0.0
    %1114 = vmatpush1.msra.mxu0 0.0
    %1115 = vmatprep.subr.mxu0 0.0
    %1116 = vmatpush1.msra.mxu0 0.0
    %1117 = vmatprep.subr.mxu0 0.0
    %1118 = vmatpush1.msra.mxu0 0.0
    %1119 = vmatprep.subr.mxu0 0.0
    %1120 = vmatpush1.msra.mxu0 0.0
    %1121 = vmatprep.subr.mxu0 0.0
    %1122 = vmatpush1.msra.mxu0 0.0
    %1123 = vmatprep.subr.mxu0 0.0
    %1124 = vmatpush1.msra.mxu0 0.0
    %1125 = vmatprep.subr.mxu0 0.0
    %1126 = vmatpush1.msra.mxu0 0.0
    %1127 = vmatprep.subr.mxu0 0.0
    %1128 = vmatpush1.msra.mxu0 0.0
    %1129 = vmatprep.subr.mxu0 0.0
    %1130 = vmatpush1.msra.mxu0 0.0
    %1131 = vmatprep.subr.mxu0 0.0
    %1132 = vmatpush1.msra.mxu0 0.0
    %1133 = vmatprep.mubr.f32.mxu0 0.0
    %1134 = vmatmul.mubr.f32.gmra.mrb[0].mxu0 %v1045
    %v1135 = vpop.f32.mrb[0].mxu0
    %v1136 = vadd.f32 %v1067, %v1135
    %v1137 = vpop.f32.mrb[0].mxu0
    %1138 = vdwg.mxu0
    %1139 = vst [vmem:[#allocation11] sm:$0xff] %v1136
    // Predicated region
    $region50: #{tpu_custom_call.1} parent=1 // pred_check
      _
    $region51: #{tpu_custom_call.1} parent=1 // pred_check_branch
      %1141 = sbr.rel (0) target = $region53
    $region52: #{tpu_custom_call.1} parent=1 // pred_region
      %s1143 = ssub.s32 128, 128
      %1144 = vsyncadd [#allocation4], %s1143
      %s1146 = sshll.u32 [#allocation11], 4
      %s1147 = int_to_ptr.vmem [resolvable:$true] %s1146
      %1149 = dma.vmem_to_hbm [thread:$0]  %s1147, 128, %s7, [#allocation4]
    $region53: #{tpu_custom_call.1} parent=1 // pred_fallthru
      _
    // Predicated region
    $region54: #{tpu_custom_call.1} parent=1 // pred_check
      _
    $region55: #{tpu_custom_call.1} parent=1 // pred_check_branch
      %1151 = sbr.rel (0) target = $region57
    $region56: #{tpu_custom_call.1} parent=1 // pred_region
      %1152 = dma.done [#allocation4], 128
    $region57: #{tpu_custom_call.1} parent=1 // pred_fallthru
      _
    %1153 = vsyncpa [#allocation3], 1
    %1154 = vsyncpa [#allocation6], 1
    %1155 = vsyncpa [#allocation9], 1
    %1156 = vsyncpa [#allocation4], 1

</llo_original>
